<compile_context>
chip_gen: v7x
topology: tpu7x:2x2x1
jax: 0.10.0
libtpu: 0.0.40
codegen_flags: <defaults>
</compile_context>

<pallas_src>
import functools

import jax
import jax.numpy as jnp
from jax.experimental import pallas as pl
from jax.experimental.pallas import tpu as pltpu


def _vmem_capacity_bytes() -> int:
    """Physical VMEM per TensorCore; conservative fallback if query fails."""
    try:
        return int(pltpu.get_tpu_info().vmem_capacity_bytes)
    except Exception:
        return 64 * 1024 * 1024  # v7x per-TC VMEM; safe lower bound everywhere


def _row_align(itemsize: int) -> int:
    if itemsize >= 4:
        return 8
    if itemsize == 2:
        return 16
    return 32  # int8 / fp8: native sublane packing is 32 rows per vreg


def _choose_tile_b(B: int, D: int, itemsize: int, row_align: int) -> int:
    """Batch tile: ~1 MiB blocks, many grid steps, aligned rows."""
    if B <= row_align:
        # Single block spanning the whole batch (block dim == full array dim
        # is always a legal block shape).
        return B

    block_bytes_target = 1 << 20  # ~1 MiB input per block saturates HBM BW
    per_row = D * itemsize
    tile_b = max(row_align, (block_bytes_target // per_row) // row_align * row_align)

    # Keep >= ~8 grid steps when B allows it: gives the pipeline several
    # iterations per TensorCore (v7x has 2 cores on the "parallel" axis).
    min_steps = 8
    if B > min_steps * row_align:
        cap = pl.cdiv(pl.cdiv(B, min_steps), row_align) * row_align
        tile_b = min(tile_b, cap)

    # Never exceed the (row-aligned) batch itself.
    tile_b = min(tile_b, pl.cdiv(B, row_align) * row_align)
    return int(tile_b)


def _normalize_kernel(x_ref, o_ref, *, power: float):
    # One (tile_b, D) block per grid step; reduce over the full feature dim.
    xf = x_ref[...].astype(jnp.float32)

    if float(power) == 2.0:
        # x^2 -> row sum -> rsqrt (EUP, once per row) -> one VALU mul / elem.
        sum_sq = jnp.sum(xf * xf, axis=1, keepdims=True)
        inv_norm = jax.lax.rsqrt(sum_sq)
    else:
        p_int = int(power)
        if float(p_int) == float(power) and 1 <= p_int <= 8:
            # Small integer exponent: repeated VALU multiplies (matches
            # torch.pow on negative bases for integer exponents).
            xp = xf
            for _ in range(p_int - 1):
                xp = xp * xf
        else:
            # TODO(synk): non-integer exponent lowers to exp(p*log(x)) and is
            # NaN for negative x (same as torch.pow with a float exponent).
            xp = jnp.power(xf, float(power))
        s = jnp.sum(xp, axis=1, keepdims=True)
        norm = jnp.power(s, 1.0 / float(power))  # only on the (tile_b, 1) column
        inv_norm = pl.reciprocal(norm, approx=False)

    # Re-read the block for the scale so the f32 temp above need not stay live
    # across the cross-lane reduction (halves peak compute scratch; the extra
    # VMEM load is free — vld slots are nowhere near the bottleneck).
    # Note: all-zero rows give 0 * inf = NaN, matching the torch module (no eps).
    o_ref[...] = (x_ref[...].astype(jnp.float32) * inv_norm).astype(o_ref.dtype)


def normalize(x: jax.Array, power: float = 2.0) -> jax.Array:
    """L-p normalize along dim 1 (feature dim) of a (B, D) array."""
    assert x.ndim == 2, "expected (batch, features)"
    B, D = x.shape
    dtype = x.dtype
    itemsize = jnp.dtype(dtype).itemsize

    row_align = _row_align(itemsize)
    vmem_cap = _vmem_capacity_bytes()

    # Guard the very-wide-D case: even a minimal block (double-buffered in+out
    # plus f32 temporaries) must fit comfortably in VMEM.
    min_block_bytes = row_align * D * (4 * itemsize + 3 * 4)
    if min_block_bytes > (vmem_cap * 3) // 4:
        # TODO(synk): very wide feature dims need a 2-axis grid over D with a
        # per-row accumulator + pl.when finalize; not needed for this module.
        raise ValueError(
            f"feature dim D={D} too large for a single-pass Normalize block")

    tile_b = _choose_tile_b(B, D, itemsize, row_align)
    grid = (pl.cdiv(B, tile_b),)

    # VMEM budget: in+out blocks (double-buffered) + f32 compute temporaries,
    # never above ~75% of physical capacity.
    vmem_needed = (4 * tile_b * D * itemsize      # in + out, 2 pipeline buffers
                   + 3 * tile_b * D * 4           # f32 temporaries in the body
                   + (2 << 20))                   # headroom
    vmem_limit = int(min((vmem_cap * 3) // 4, max(vmem_needed, 16 << 20)))

    kernel = functools.partial(_normalize_kernel, power=power)

    return pl.pallas_call(
        kernel,
        out_shape=jax.ShapeDtypeStruct((B, D), dtype),
        grid_spec=pltpu.PrefetchScalarGridSpec(
            num_scalar_prefetch=0,
            grid=grid,
            in_specs=[pl.BlockSpec((tile_b, D), lambda i: (i, 0))],
            out_specs=pl.BlockSpec((tile_b, D), lambda i: (i, 0)),
        ),
        compiler_params=pltpu.CompilerParams(
            dimension_semantics=("parallel",),
            vmem_limit_bytes=vmem_limit,
        ),
    )(x)


if __name__ == "__main__":
    key = jax.random.PRNGKey(0)

    # Primary shape: small feature-head output.
    B, D = 16, 64
    x = jax.random.normal(key, (B, D), dtype=jnp.float32)

    # Default power=2 (the module's default).
    out = jax.block_until_ready(normalize(x, power=2.0))
    ref = x / jnp.sqrt(jnp.sum(x * x, axis=1, keepdims=True))
    assert out.shape == x.shape and out.dtype == x.dtype
    assert jnp.allclose(out, ref, atol=1e-5, rtol=1e-5)

    # Unaligned shape (ragged batch block + non-multiple-of-128 feature dim),
    # exercised without any wrapper-side padding.
    Bu, Du = 13, 100
    xu = jax.random.normal(jax.random.PRNGKey(1), (Bu, Du), dtype=jnp.float32)
    outu = jax.block_until_ready(normalize(xu, power=2.0))
    refu = xu / jnp.sqrt(jnp.sum(xu * xu, axis=1, keepdims=True))
    assert outu.shape == xu.shape
    assert jnp.allclose(outu, refu, atol=1e-5, rtol=1e-5)

    # Integer power path (power=3) on positive inputs.
    xp = jnp.abs(x) + 0.1
    out3 = jax.block_until_ready(normalize(xp, power=3.0))
    ref3 = xp / jnp.power(jnp.sum(xp ** 3, axis=1, keepdims=True), 1.0 / 3.0)
    assert jnp.allclose(out3, ref3, atol=1e-5, rtol=1e-5)

    print("KERNEL_OK")
</pallas_src>

<mosaic_0001>
module attributes {stable_mosaic.version = 11 : i64} {
  func.func @_normalize_kernel(%arg0: i32, %arg1: memref<16x64xf32, #tpu.memory_space<vmem>>, %arg2: memref<16x64xf32, #tpu.memory_space<vmem>>) attributes {dimension_semantics = [#tpu.dimension_semantics<parallel>], iteration_bounds = array<i64: 1>, scalar_prefetch = 0 : i64, scratch_operands = 0 : i64, tpu.core_type = #tpu.core_type<tc>, window_params = [{transform_indices = @transform_0, window_bounds = array<i64: 16, 64>}, {transform_indices = @transform_1, window_bounds = array<i64: 16, 64>}]} {
    %c0 = arith.constant 0 : index
    %c0_0 = arith.constant 0 : index
    %0 = vector.load %arg1[%c0, %c0_0] : memref<16x64xf32, #tpu.memory_space<vmem>>, vector<16x64xf32>
    %1 = arith.mulf %0, %0 : vector<16x64xf32>
    %cst = arith.constant dense<0.000000e+00> : vector<16xf32>
    %2 = vector.multi_reduction <add>, %1, %cst [1] : vector<16x64xf32> to vector<16xf32>
    %3 = vector.shape_cast %2 : vector<16xf32> to vector<16x1xf32>
    %4 = math.rsqrt %3 : vector<16x1xf32>
    %c0_1 = arith.constant 0 : index
    %c0_2 = arith.constant 0 : index
    %5 = vector.load %arg1[%c0_1, %c0_2] : memref<16x64xf32, #tpu.memory_space<vmem>>, vector<16x64xf32>
    %6 = vector.broadcast %4 : vector<16x1xf32> to vector<16x64xf32>
    %7 = arith.mulf %5, %6 : vector<16x64xf32>
    %c0_3 = arith.constant 0 : index
    %c0_4 = arith.constant 0 : index
    %8 = vector.load %arg2[%c0_3, %c0_4] : memref<16x64xf32, #tpu.memory_space<vmem>>, vector<16x64xf32>
    tpu.vector_store %arg2[%c0_3, %c0_4], %7 {strides = array<i32>} : memref<16x64xf32, #tpu.memory_space<vmem>>, vector<16x64xf32>,
    return
  }
  func.func @transform_0(%arg0: i32) -> (i32, i32) {
    %c0_i32 = arith.constant 0 : i32
    %c0_i32_0 = arith.constant 0 : i32
    return %arg0, %c0_i32 : i32, i32
  }
  func.func @transform_1(%arg0: i32) -> (i32, i32) {
    %c0_i32 = arith.constant 0 : i32
    %c0_i32_0 = arith.constant 0 : i32
    return %arg0, %c0_i32 : i32, i32
  }
}

</mosaic_0001>

<llo_original>
// kernel: tpu_custom_call.1
$region0: #{tpu_custom_call.1}
  #allocation0 [shape = 'u32[]', space=smem, size = 0x4, offset = 0x4, fixed_abs, tag = 'smem constant byte address 0x4 - core index']
  #allocation1 [shape = 'u32[144,128]{1,0:T(1,128)}', space=vmem, size = 0x12000, scoped, tag = 'internal scratch']
  %s0 = inlined_call_operand.hbm [shape: f32[16,64], index: 0, kind: input, shape index: {}]
  %s1 = inlined_call_operand.hbm [shape: f32[16,64], index: 1, kind: output, shape index: {}]
  %s2 = sld [smem:[#allocation0]]
  $region18: #{tpu_custom_call.1} parent=0
    _
  %s4 = ssub.s32 1, %s2
  %s5 = scalar_select 0, %s4, %s2
  $region1: #{tpu_custom_call.1} parent=0
    #allocation2 [shape = 'u8[8192]{0}', space=vmem, size = 0x2000, scoped, tag = 'input window, operand 0, single buffered']
    #allocation3 [shape = 's32[1]{0}', space=sflag, size = 0x4, scoped, tag = 'scoped memory for tpu_custom_call.1']
    #allocation4 [shape = 's32[1]{0}', space=sflag, size = 0x4, scoped, tag = 'scoped memory for tpu_custom_call.1']
    #allocation5 [shape = 'u8[8192]{0}', space=vmem, size = 0x2000, scoped, tag = 'output window, operand 0, single buffered']
    %6 = vsyncpa [#allocation3], 0
    %7 = vsyncpa [#allocation4], 0
    // Predicated region
    $region2: #{tpu_custom_call.1} parent=1 // pred_check
      _
    $region3: #{tpu_custom_call.1} parent=1 // pred_check_branch
      %9 = sbr.rel (0) target = $region5
    $region4: #{tpu_custom_call.1} parent=1 // pred_region
      %s11 = ssub.s32 256, 256
      %12 = vsyncadd [#allocation3], %s11
      %s13 = sshll.u32 [#allocation2], 4
      %s14 = int_to_ptr.vmem [resolvable:$true] %s13
      %19 = dma.hbm_to_vmem [thread:$0]  %s0, 256, %s14, [#allocation3], 128, 128, 8
    $region5: #{tpu_custom_call.1} parent=1 // pred_fallthru
      _
    // Predicated region
    $region6: #{tpu_custom_call.1} parent=1 // pred_check
      _
    $region7: #{tpu_custom_call.1} parent=1 // pred_check_branch
      %21 = sbr.rel (0) target = $region9
    $region8: #{tpu_custom_call.1} parent=1 // pred_region
      %22 = dma.done [#allocation3], 256
    $region9: #{tpu_custom_call.1} parent=1 // pred_fallthru
      _
    %v23 = vld [vmem:[#allocation2] sm:$0xff]
    %v24 = vld [vmem:[#allocation2 + $0x8] sm:$0xff]
    %v25 = vmul.f32 %v23, %v23
    %v26 = vmul.f32 %v24, %v24
    %vm27 = vcmask 523264
    %v28 = vsel %vm27, %v25, 0.0
    %29 = vadd.xlane.f32.xlu0 %v28
    %v30 = vpop.xlane.xlu0 %29
    %v31 = vsel %vm27, %v26, 0.0
    %32 = vadd.xlane.f32.xlu0 %v31
    %v33 = vpop.xlane.xlu0 %32
    %v34 = vrsqrt.pop %v30
    %v35 = vrsqrt.pop %v33
    %v36 = vmul.f32 %v23, %v34
    %v37 = vmul.f32 %v24, %v35
    %38 = vst.msk [vmem:[#allocation5] sm:$0xff] %vm27, %v36
    %39 = vst.msk [vmem:[#allocation5 + $0x8] sm:$0xff] %vm27, %v37
    // Predicated region
    $region10: #{tpu_custom_call.1} parent=1 // pred_check
      _
    $region11: #{tpu_custom_call.1} parent=1 // pred_check_branch
      %41 = sbr.rel (0) target = $region13
    $region12: #{tpu_custom_call.1} parent=1 // pred_region
      %s43 = ssub.s32 256, 256
      %44 = vsyncadd [#allocation4], %s43
      %s45 = sshll.u32 [#allocation5], 4
      %s46 = int_to_ptr.vmem [resolvable:$true] %s45
      %51 = dma.vmem_to_hbm [thread:$0]  %s46, 256, %s1, [#allocation4], 128, 128, 8
    $region13: #{tpu_custom_call.1} parent=1 // pred_fallthru
      _
    // Predicated region
    $region14: #{tpu_custom_call.1} parent=1 // pred_check
      _
    $region15: #{tpu_custom_call.1} parent=1 // pred_check_branch
      %53 = sbr.rel (0) target = $region17
    $region16: #{tpu_custom_call.1} parent=1 // pred_region
      %54 = dma.done [#allocation4], 256
    $region17: #{tpu_custom_call.1} parent=1 // pred_fallthru
      _
    %55 = vsyncpa [#allocation3], 1
    %56 = vsyncpa [#allocation4], 1

</llo_original>
